<compile_context>
chip_gen: v5e
topology: v5e:2x2
jax: 0.10.0
libtpu: 0.0.40
codegen_flags: <defaults>
</compile_context>

<pallas_src>
import jax
import jax.numpy as jnp
from jax import lax
from jax.experimental import pallas as pl
from jax.experimental.pallas import tpu as pltpu


_MAX_TILE_N = 8192          # upper bound on rows per grid step (diminishing returns above)
_STATS_CORE_SPLIT = 2       # leading "parallel" axis of kernel A (v7x has 2 TCs/chip)


def _round_up(a, b):
    return ((a + b - 1) // b) * b


def _cdiv(a, b):
    return (a + b - 1) // b


def _vmem_budget_bytes():
    """Per-generation scoped-VMEM budget with headroom (v7x 64 MiB -> ~48 MiB plan)."""
    cap = 64 * 1024 * 1024
    try:
        cap = int(pltpu.get_tpu_info().vmem_capacity_bytes)
    except Exception:
        pass
    return min(cap * 3 // 4, 100 * 1024 * 1024)


def _pick_layout(n, c, budget_bytes):
    """Choose (pack, tile_n, n_pad, steps_per_core).

    pack rows per lane-row so the packed feature dim is 128 (lane-dense loads, unmasked
    stores, contraction width >= 128 in kernel B).  tile_n is the largest sublane-aligned
    tile fitting the VMEM budget (kernel B needs ~4 double-buffered (tile, C) f32 slabs
    plus the resident weight), then shrunk so batch zero-padding stays small.
    """
    pack = 128 // c if (c <= 64 and 128 % c == 0) else 1
    packc = pack * c
    align = 8 * pack                                   # sublane alignment in packed layout
    w_bytes = 2 * (packc * packc + packc) * 4          # resident W + mean (allow 2 copies)
    max_tile = (budget_bytes - w_bytes) // (16 * c)    # 2x in-buffers + 2x out-buffers, f32
    max_tile = max(align, min(_MAX_TILE_N, (max_tile // align) * align))
    # Smallest number of (core x step) chunks so each chunk <= max_tile; padding is then
    # bounded by one alignment unit per chunk instead of up to a whole tile.
    chunks = _STATS_CORE_SPLIT * max(1, _cdiv(n, _STATS_CORE_SPLIT * max_tile))
    tile_n = _round_up(_cdiv(n, chunks), align)
    n_pad = tile_n * chunks
    return pack, tile_n, n_pad, chunks // _STATS_CORE_SPLIT


# --------------------------------------------------------------------------
# Kernel A: streaming pivot-shifted batch statistics  (sum(y), Y^T Y), per-core partials
# --------------------------------------------------------------------------
def _stats_kernel(x_ref, p_ref, sum_ref, xtx_ref):
    step = pl.program_id(1)

    @pl.when(step == 0)
    def _():
        sum_ref[...] = jnp.zeros_like(sum_ref)
        xtx_ref[...] = jnp.zeros_like(xtx_ref)

    # Pivot shift y = x - x[0] (VPU, hidden under the MXU matmul) removes the bulk of the
    # mean before squaring -> avoids catastrophic cancellation in the cov finalize.
    y = x_ref[...] - p_ref[...]                               # (tile_n, C) f32
    sum_ref[...] += jnp.sum(y, axis=0, keepdims=True)[None]
    # Y^T Y: contract the batch (sublane) dim on the MXU with f32 accumulation.
    # TODO(synk): if the bundle dump shows a per-step vxpose of the (tile_n, C) tile,
    # switch to an explicit transposed-LHS matmul form (verify on hardware).
    xtx_ref[...] += lax.dot_general(
        y, y,
        dimension_numbers=(((0,), (0,)), ((), ())),
        preferred_element_type=jnp.float32,
    )[None]


def _compute_stats(x_padded, pivot, tile_n, steps_per_core, vmem_limit):
    n_pad, c = x_padded.shape
    cores = _STATS_CORE_SPLIT
    cost = pl.CostEstimate(
        flops=2 * n_pad * c * c + 2 * n_pad * c,
        transcendentals=0,
        bytes_accessed=(n_pad * c + cores * (c * c + c) + c) * 4,
    )
    return pl.pallas_call(
        _stats_kernel,
        out_shape=(
            jax.ShapeDtypeStruct((cores, 1, c), jnp.float32),   # per-core sum(y)
            jax.ShapeDtypeStruct((cores, c, c), jnp.float32),   # per-core Y^T Y
        ),
        grid_spec=pltpu.PrefetchScalarGridSpec(
            num_scalar_prefetch=0,
            grid=(cores, steps_per_core),
            in_specs=[
                pl.BlockSpec((tile_n, c),
                             lambda core, i: (core * steps_per_core + i, 0)),
                pl.BlockSpec((1, c), lambda core, i: (0, 0)),   # pivot row, resident
            ],
            out_specs=(
                # Constant block index over the "arbitrary" axis -> VMEM-resident
                # accumulators; zero-init via pl.when(step == 0), no scratch copies.
                pl.BlockSpec((1, 1, c), lambda core, i: (core, 0, 0)),
                pl.BlockSpec((1, c, c), lambda core, i: (core, 0, 0)),
            ),
        ),
        compiler_params=pltpu.CompilerParams(
            dimension_semantics=("parallel", "arbitrary"),      # cores x N-reduction
            vmem_limit_bytes=vmem_limit,
        ),
        cost_estimate=cost,
    )(x_padded, pivot)


# --------------------------------------------------------------------------
# Kernel B: fused centering + decorrelation (the 1x1 conv):  out = (x - m) @ inv_sqrt.T
# --------------------------------------------------------------------------
def _decorrelate_kernel(x_ref, m_ref, wt_ref, out_ref):
    xn = x_ref[...] - m_ref[...]          # centering fused here; no xn HBM round-trip
    out_ref[...] = jnp.dot(xn.astype(wt_ref.dtype), wt_ref[...],
                           preferred_element_type=jnp.float32).astype(out_ref.dtype)


def _decorrelate(x_packed, m_packed, w_packed, tile_rows, vmem_limit):
    n_rows, packc = x_packed.shape
    cost = pl.CostEstimate(
        flops=2 * n_rows * packc * packc + n_rows * packc,
        transcendentals=0,
        bytes_accessed=(2 * n_rows * packc + packc * packc + packc) * 4,
    )
    return pl.pallas_call(
        _decorrelate_kernel,
        out_shape=jax.ShapeDtypeStruct((n_rows, packc), jnp.float32),
        grid_spec=pltpu.PrefetchScalarGridSpec(
            num_scalar_prefetch=0,
            grid=(n_rows // tile_rows,),
            in_specs=[
                pl.BlockSpec((tile_rows, packc), lambda i: (i, 0)),  # streamed x tiles
                pl.BlockSpec((1, packc), lambda i: (0, 0)),          # packed mean, resident
                pl.BlockSpec((packc, packc), lambda i: (0, 0)),      # block-diag inv_sqrt.T
            ],
            out_specs=pl.BlockSpec((tile_rows, packc), lambda i: (i, 0)),
        ),
        compiler_params=pltpu.CompilerParams(
            dimension_semantics=("parallel",),            # rows independent -> megacore
            vmem_limit_bytes=vmem_limit,
        ),
        cost_estimate=cost,
    )(x_packed, m_packed, w_packed)


# --------------------------------------------------------------------------
# Whitening2d forward (training mode, track_running_stats=True)
# --------------------------------------------------------------------------
def whitening2d_forward(x, running_mean, running_variance, momentum=0.01, eps=0.0,
                        use_bf16_matmul=False):
    """Returns (decorrelated, new_running_mean, new_running_variance).

    Matches lightly's Whitening2d.forward in training mode. x: (N, num_features) f32.
    use_bf16_matmul: optional bf16 MXU path for kernel B only (stats/Cholesky stay f32);
    off by default since it changes output numerics slightly.
    """
    n, c = x.shape
    budget = _vmem_budget_bytes()
    pack, tile_n, n_pad, steps_per_core = _pick_layout(n, c, budget)

    # Zero-pad the batch so the grid divides evenly; zero rows add nothing to the
    # (pivot-shifted) stats once re-centred... actually they contribute -pivot, so pad
    # AFTER the pivot shift is accounted for: padded rows equal the pivot row instead,
    # i.e. y = 0 for them -> no contribution to sum(y) / Y^T Y.  Their decorrelated rows
    # are sliced off below.
    pivot = x[:1, :]                                     # per-feature pivot (row 0)
    if n_pad == n:
        x_padded = x
    else:
        x_padded = jnp.concatenate(
            [x, jnp.broadcast_to(pivot, (n_pad - n, c))], axis=0)

    # Kernel A: single streaming pass over x, per-core partial sums.
    part_sum, part_xtx = _compute_stats(x_padded, pivot, tile_n, steps_per_core, budget)
    sum_y = jnp.sum(part_sum, axis=0)                    # (1, C)
    yty = jnp.sum(part_xtx, axis=0)                      # (C, C)

    # Glue: finalize mean / covariance, shrink, Cholesky, triangular solve.
    # TODO(synk): Cholesky + triangular solve have no clean Pallas TPU equivalent; done
    # in plain JAX on the tiny (C, C) matrices.
    mu_y = sum_y / jnp.float32(n)
    m = pivot + mu_y
    f_cov = (yty - jnp.float32(n) * (mu_y.T @ mu_y)) / jnp.float32(n - 1)
    eye = jnp.eye(c, dtype=jnp.float32)
    f_cov_shrinked = (1.0 - eps) * f_cov + eps * eye
    chol = jnp.linalg.cholesky(f_cov_shrinked)
    inv_sqrt = jax.scipy.linalg.solve_triangular(chol, eye, lower=True)

    # Kernel B: centering + 1x1-conv-as-matmul, lane-dense packed layout for small C.
    w_t = inv_sqrt.T
    if pack > 1:
        w_t = jnp.kron(jnp.eye(pack, dtype=jnp.float32), w_t)   # block-diag (pack*C)^2
    if use_bf16_matmul:
        w_t = w_t.astype(jnp.bfloat16)
    x_packed = x_padded.reshape(n_pad // pack, pack * c)        # contiguous -> free reshape
    m_packed = jnp.tile(m, (1, pack))
    out_packed = _decorrelate(x_packed, m_packed, w_t, tile_n // pack, budget)
    decorrelated = out_packed.reshape(n_pad, c)[:n]

    # Running-stat EMA updates (buffers, plain JAX glue).
    new_running_mean = momentum * m + (1.0 - momentum) * running_mean
    new_running_variance = momentum * f_cov + (1.0 - momentum) * running_variance

    return decorrelated, new_running_mean, new_running_variance


if __name__ == "__main__":
    # Batch N must exceed num_features so the batch covariance is full rank
    # (eps defaults to 0 in the module).
    N, C = 128, 32

    key = jax.random.PRNGKey(0)
    # Non-zero mean exercises the pivot-shifted (cancellation-safe) stats path.
    x = jax.random.normal(key, (N, C), dtype=jnp.float32) + 3.0

    # Buffer init as in __init__: zeros mean, identity variance.
    running_mean = jnp.zeros((1, C), dtype=jnp.float32)
    running_variance = jnp.eye(C, dtype=jnp.float32)

    out, rm, rv = whitening2d_forward(x, running_mean, running_variance,
                                      momentum=0.01, eps=0.0)
    jax.block_until_ready((out, rm, rv))

    # Sanity: whitened output has (approximately) identity sample covariance.
    cov_out = (out.T @ out) / (N - 1)
    assert out.shape == (N, C)
    assert bool(jnp.allclose(cov_out, jnp.eye(C), atol=1e-3)), "whitening failed"

    print("KERNEL_OK")
</pallas_src>

<mosaic_0001>
module attributes {stable_mosaic.version = 11 : i64} {
  func.func @_stats_kernel(%arg0: i32, %arg1: i32, %arg2: memref<64x32xf32, #tpu.memory_space<vmem>>, %arg3: memref<1x32xf32, #tpu.memory_space<vmem>>, %arg4: memref<1x1x32xf32, #tpu.memory_space<vmem>>, %arg5: memref<1x32x32xf32, #tpu.memory_space<vmem>>) attributes {dimension_semantics = [#tpu.dimension_semantics<parallel>, #tpu.dimension_semantics<arbitrary>], iteration_bounds = array<i64: 2, 1>, scalar_prefetch = 0 : i64, scratch_operands = 0 : i64, tpu.core_type = #tpu.core_type<tc>, window_params = [{transform_indices = @transform_0, window_bounds = array<i64: 64, 32>}, {pipeline_mode = #tpu.pipeline_mode<synchronous>, transform_indices = @transform_1, window_bounds = array<i64: 1, 32>}, {transform_indices = @transform_2, window_bounds = array<i64: 1, 1, 32>}, {transform_indices = @transform_3, window_bounds = array<i64: 1, 32, 32>}]} {
    %c0_i32 = arith.constant 0 : i32
    %0 = arith.cmpi eq, %arg1, %c0_i32 : i32
    %1 = arith.extui %0 : i1 to i32
    %c0_i32_0 = arith.constant 0 : i32
    %2 = arith.cmpi ne, %1, %c0_i32_0 : i32
    scf.if %2 {
      %cst_17 = arith.constant 0.000000e+00 : f32
      %18 = vector.broadcast %cst_17 : f32 to vector<1x1x32xf32>
      %c0_18 = arith.constant 0 : index
      %c0_19 = arith.constant 0 : index
      %c0_20 = arith.constant 0 : index
      %19 = vector.load %arg4[%c0_18, %c0_19, %c0_20] : memref<1x1x32xf32, #tpu.memory_space<vmem>>, vector<1x1x32xf32>
      tpu.vector_store %arg4[%c0_18, %c0_19, %c0_20], %18 {strides = array<i32>} : memref<1x1x32xf32, #tpu.memory_space<vmem>>, vector<1x1x32xf32>,
      %cst_21 = arith.constant 0.000000e+00 : f32
      %20 = vector.broadcast %cst_21 : f32 to vector<1x32x32xf32>
      %c0_22 = arith.constant 0 : index
      %c0_23 = arith.constant 0 : index
      %c0_24 = arith.constant 0 : index
      %21 = vector.load %arg5[%c0_22, %c0_23, %c0_24] : memref<1x32x32xf32, #tpu.memory_space<vmem>>, vector<1x32x32xf32>
      tpu.vector_store %arg5[%c0_22, %c0_23, %c0_24], %20 {strides = array<i32>} : memref<1x32x32xf32, #tpu.memory_space<vmem>>, vector<1x32x32xf32>,
    } else {
    }
    %c0 = arith.constant 0 : index
    %c0_1 = arith.constant 0 : index
    %3 = vector.load %arg2[%c0, %c0_1] : memref<64x32xf32, #tpu.memory_space<vmem>>, vector<64x32xf32>
    %c0_2 = arith.constant 0 : index
    %c0_3 = arith.constant 0 : index
    %4 = vector.load %arg3[%c0_2, %c0_3] : memref<1x32xf32, #tpu.memory_space<vmem>>, vector<1x32xf32>
    %5 = vector.broadcast %4 : vector<1x32xf32> to vector<64x32xf32>
    %6 = arith.subf %3, %5 : vector<64x32xf32>
    %c0_4 = arith.constant 0 : index
    %c0_5 = arith.constant 0 : index
    %c0_6 = arith.constant 0 : index
    %7 = vector.load %arg4[%c0_4, %c0_5, %c0_6] : memref<1x1x32xf32, #tpu.memory_space<vmem>>, vector<1x1x32xf32>
    %cst = arith.constant dense<0.000000e+00> : vector<32xf32>
    %8 = vector.multi_reduction <add>, %6, %cst [0] : vector<64x32xf32> to vector<32xf32>
    %9 = vector.shape_cast %8 : vector<32xf32> to vector<1x32xf32>
    %10 = vector.shape_cast %9 : vector<1x32xf32> to vector<1x1x32xf32>
    %11 = arith.addf %7, %10 : vector<1x1x32xf32>
    %c0_7 = arith.constant 0 : index
    %c0_8 = arith.constant 0 : index
    %c0_9 = arith.constant 0 : index
    %12 = vector.load %arg4[%c0_7, %c0_8, %c0_9] : memref<1x1x32xf32, #tpu.memory_space<vmem>>, vector<1x1x32xf32>
    tpu.vector_store %arg4[%c0_7, %c0_8, %c0_9], %11 {strides = array<i32>} : memref<1x1x32xf32, #tpu.memory_space<vmem>>, vector<1x1x32xf32>,
    %c0_10 = arith.constant 0 : index
    %c0_11 = arith.constant 0 : index
    %c0_12 = arith.constant 0 : index
    %13 = vector.load %arg5[%c0_10, %c0_11, %c0_12] : memref<1x32x32xf32, #tpu.memory_space<vmem>>, vector<1x32x32xf32>
    %cst_13 = arith.constant dense<0.000000e+00> : vector<32x32xf32>
    %14 = tpu.matmul %6, %6, %cst_13 {dimension_numbers = #tpu.dot_dimension_numbers<[0], [0], [1], [1], [0, 1, 1, 1], [], []>} : vector<64x32xf32>, vector<64x32xf32>, vector<32x32xf32> -> vector<32x32xf32>
    %15 = vector.shape_cast %14 : vector<32x32xf32> to vector<1x32x32xf32>
    %16 = arith.addf %13, %15 : vector<1x32x32xf32>
    %c0_14 = arith.constant 0 : index
    %c0_15 = arith.constant 0 : index
    %c0_16 = arith.constant 0 : index
    %17 = vector.load %arg5[%c0_14, %c0_15, %c0_16] : memref<1x32x32xf32, #tpu.memory_space<vmem>>, vector<1x32x32xf32>
    tpu.vector_store %arg5[%c0_14, %c0_15, %c0_16], %16 {strides = array<i32>} : memref<1x32x32xf32, #tpu.memory_space<vmem>>, vector<1x32x32xf32>,
    return
  }
  func.func @transform_0(%arg0: i32, %arg1: i32) -> (i32, i32) {
    %c1_i32 = arith.constant 1 : i32
    %0 = arith.muli %arg0, %c1_i32 : i32
    %1 = arith.addi %0, %arg1 : i32
    %c0_i32 = arith.constant 0 : i32
    %c0_i32_0 = arith.constant 0 : i32
    return %1, %c0_i32 : i32, i32
  }
  func.func @transform_1(%arg0: i32, %arg1: i32) -> (i32, i32) {
    %c0_i32 = arith.constant 0 : i32
    %c0_i32_0 = arith.constant 0 : i32
    %c0_i32_1 = arith.constant 0 : i32
    return %c0_i32, %c0_i32_0 : i32, i32
  }
  func.func @transform_2(%arg0: i32, %arg1: i32) -> (i32, i32, i32) {
    %c0_i32 = arith.constant 0 : i32
    %c0_i32_0 = arith.constant 0 : i32
    %c0_i32_1 = arith.constant 0 : i32
    return %arg0, %c0_i32, %c0_i32_0 : i32, i32, i32
  }
  func.func @transform_3(%arg0: i32, %arg1: i32) -> (i32, i32, i32) {
    %c0_i32 = arith.constant 0 : i32
    %c0_i32_0 = arith.constant 0 : i32
    %c0_i32_1 = arith.constant 0 : i32
    return %arg0, %c0_i32, %c0_i32_0 : i32, i32, i32
  }
}

</mosaic_0001>

<llo_original>
// kernel: tpu_custom_call.1
$region0: #{tpu_custom_call.1}
  #allocation0 [shape = 'u32[]', space=smem, size = 0x4, offset = 0x4, fixed_abs, tag = 'smem constant byte address 0x4 - core index']
  #allocation1 [shape = 'u32[72,128]{1,0:T(1,128)}', space=vmem, size = 0x9000, scoped, tag = 'internal scratch']
  %s0 = inlined_call_operand.vmem [shape: f32[128,32], index: 0, kind: input, shape index: {}]
  %s1 = inlined_call_operand.vmem [shape: f32[1,32], index: 1, kind: input, shape index: {}]
  %s2 = inlined_call_operand.hbm [shape: f32[2,1,32], index: 2, kind: output, shape index: {0}]
  %s3 = inlined_call_operand.hbm [shape: f32[2,32,32], index: 3, kind: output, shape index: {1}]
  %4 = xla_tuple %s2, %s3
  %s5 = sld [smem:[#allocation0]]
  $region53: #{tpu_custom_call.1} parent=0
    _
  %s7 = ssub.s32 1, %s5
  %s8 = scalar_select 0, %s7, %s5
  $region1: #{tpu_custom_call.1} parent=0
    #allocation2 [shape = 'u8[1024]{0}', space=vmem, size = 0x400, scoped, tag = 'output window, operand 0']
    #allocation3 [shape = 's32[2]{0}', space=sflag, size = 0x8, scoped, tag = 'scoped memory for tpu_custom_call.1']
    #allocation4 [shape = 'u8[32768]{0}', space=vmem, size = 0x8000, scoped, tag = 'output window, operand 1']
    #allocation5 [shape = 's32[2]{0}', space=sflag, size = 0x8, scoped, tag = 'scoped memory for tpu_custom_call.1']
    %9 = vsyncpa [#allocation3], 0
    %s10 = scalar_lea.sflag [#allocation3], 1
    %11 = vsyncpa %s10, 0
    %12 = vsyncpa [#allocation5], 0
    %s13 = scalar_lea.sflag [#allocation5], 1
    %14 = vsyncpa %s13, 0
    loop: start=0, step=1, limit=4
    $region2: #{tpu_custom_call.1} parent=1 // loop_pre_header
      _
    $region3: #{tpu_custom_call.1} parent=1 // loop_header
      %s16 = sphi 0, %s20
      %p17 = scmp.ge.s32.totalorder %s16, 4
      %s23 = sphi 0, %s35
      %s24 = sphi 0, %s31
      %s25 = sphi 0, %s23
      %s26 = sphi 0, %s24
      %s27 = sphi 0, %s25
      %s28 = sphi 0, %s26
      %s40 = sphi 0, %s42
      %s43 = sphi 0, %s40
      %s44 = sphi 0, %s43
      %s60 = sphi 0, %s44
      %s64 = sphi 0, %s64
      %s66 = sphi 0, %s64
      %s67 = sphi 0, %s66
      %s81 = sphi 0, %s67
      %s87 = sphi 0, %s89
      %s90 = sphi 0, %s87
      %s91 = sphi 0, %s90
      %s107 = sphi 0, %s91
      %s113 = sphi 0, %s115
      %s116 = sphi 0, %s113
      %s117 = sphi 0, %s116
      %s133 = sphi 0, %s117
    $region4: #{tpu_custom_call.1} parent=1 // loop_header_branch
      %19 = sbr.rel (%p17) target = $region8
    $region5: #{tpu_custom_call.1} parent=1 // loop_body
      %s21 = ssub.s32 %s16, 1
      %s22 = ssub.s32 %s16, 2
      %s29 = sadd.s32 1, %s24
      %p30 = scmp.ge.s32.totalorder %s29, 1
      %s31 = scalar_select %p30, 0, %s29
      %s32 = sadd.s32 1, %s23
      %s33 = scalar_select %p30, %s32, %s23
      %p34 = scmp.ge.s32.totalorder %s33, 2
      %s35 = scalar_select %p34, 0, %s33
      %s36 = sadd.s32 %s23, %s24
      %s37 = sadd.s32 %s35, %s31
      %s38 = ssub.s32 %s36, %s37
      %p39 = scmp.eq.s32.totalorder %s38, 0
      %s41 = sadd.s32 %s40, 1
      %s42 = scalar_select %p39, %s40, %s41
      %p45 = pneg %p39
      %p46 = scmp.eq.s32.totalorder %s16, 1
      %p47 = por %p45, %p46
      %p48 = scmp.ne.s32.totalorder %s40, %s43
      %p49 = scmp.eq.s32.totalorder %s16, 0
      %p50 = por %p48, %p49
      %p51 = scmp.ne.s32.totalorder %s40, %s43
      %p52 = scmp.eq.s32.totalorder %s21, 1
      %p53 = por %p51, %p52
      %p54 = scmp.ne.s32.totalorder %s43, %s44
      %p55 = scmp.eq.s32.totalorder %s21, 0
      %p56 = por %p54, %p55
      %p57 = scmp.ne.s32.totalorder %s43, %s44
      %p58 = scmp.eq.s32.totalorder %s22, 1
      %p59 = por %p57, %p58
      %p61 = scmp.ne.s32.totalorder %s44, %s60
      %p62 = scmp.eq.s32.totalorder %s22, 0
      %p63 = por %p61, %p62
      %s65 = sadd.s32 %s64, 1
      %p68 = scmp.eq.s32.totalorder %s16, 1
      %p69 = scmp.ne.s32.totalorder %s64, %s66
      %p70 = scmp.eq.s32.totalorder %s16, 0
      %p71 = por %p69, %p70
      %p72 = scmp.ne.s32.totalorder %s64, %s66
      %p73 = scmp.eq.s32.totalorder %s21, 1
      %p74 = por %p72, %p73
      %p75 = scmp.ne.s32.totalorder %s66, %s67
      %p76 = scmp.eq.s32.totalorder %s21, 0
      %p77 = por %p75, %p76
      %p78 = scmp.ne.s32.totalorder %s66, %s67
      %p79 = scmp.eq.s32.totalorder %s22, 1
      %p80 = por %p78, %p79
      %p82 = scmp.ne.s32.totalorder %s67, %s81
      %p83 = scmp.eq.s32.totalorder %s22, 0
      %p84 = por %p82, %p83
      %s85 = ssub.s32 %s23, %s35
      %p86 = scmp.eq.s32.totalorder %s85, 0
      %s88 = sadd.s32 %s87, 1
      %s89 = scalar_select %p86, %s87, %s88
      %p92 = pneg %p86
      %p93 = scmp.eq.s32.totalorder %s16, 1
      %p94 = por %p92, %p93
      %p95 = scmp.ne.s32.totalorder %s87, %s90
      %p96 = scmp.eq.s32.totalorder %s16, 0
      %p97 = por %p95, %p96
      %p98 = scmp.ne.s32.totalorder %s87, %s90
      %p99 = scmp.eq.s32.totalorder %s21, 1
      %p100 = por %p98, %p99
      %p101 = scmp.ne.s32.totalorder %s90, %s91
      %p102 = scmp.eq.s32.totalorder %s21, 0
      %p103 = por %p101, %p102
      %p104 = scmp.ne.s32.totalorder %s90, %s91
      %p105 = scmp.eq.s32.totalorder %s22, 1
      %p106 = por %p104, %p105
      %p108 = scmp.ne.s32.totalorder %s91, %s107
      %p109 = scmp.eq.s32.totalorder %s22, 0
      %p110 = por %p108, %p109
      %s111 = ssub.s32 %s23, %s35
      %p112 = scmp.eq.s32.totalorder %s111, 0
      %s114 = sadd.s32 %s113, 1
      %s115 = scalar_select %p112, %s113, %s114
      %p118 = pneg %p112
      %p119 = scmp.eq.s32.totalorder %s16, 1
      %p120 = por %p118, %p119
      %p121 = scmp.ne.s32.totalorder %s113, %s116
      %p122 = scmp.eq.s32.totalorder %s16, 0
      %p123 = por %p121, %p122
      %p124 = scmp.ne.s32.totalorder %s113, %s116
      %p125 = scmp.eq.s32.totalorder %s21, 1
      %p126 = por %p124, %p125
      %p127 = scmp.ne.s32.totalorder %s116, %s117
      %p128 = scmp.eq.s32.totalorder %s21, 0
      %p129 = por %p127, %p128
      %p130 = scmp.ne.s32.totalorder %s116, %s117
      %p131 = scmp.eq.s32.totalorder %s22, 1
      %p132 = por %p130, %p131
      %p134 = scmp.ne.s32.totalorder %s117, %s133
      %p135 = scmp.eq.s32.totalorder %s22, 0
      %p136 = por %p134, %p135
      %p137 = scmp.le.s32.totalorder 1, %s16
      %p138 = scmp.lt.s32.totalorder %s16, 3
      %p139 = pnand %p137, %p138
      %p140 = pneg %p139
      // Predicated region
      $region9: #{tpu_custom_call.1} parent=5 // pred_check
        _
      $region10: #{tpu_custom_call.1} parent=5 // pred_check_branch
        %142 = sbr.rel (%p139) target = $region12
      $region11: #{tpu_custom_call.1} parent=5 // pred_region
        %s143 = ssub.s32 %s16, 1
        // Predicated region
        $region13: #{tpu_custom_call.1} parent=11 // pred_check
          %p144 = pneg %p77
        $region14: #{tpu_custom_call.1} parent=11 // pred_check_branch
          %146 = sbr.rel (%p144) target = $region16
        $region15: #{tpu_custom_call.1} parent=11 // pred_region
          _
        $region16: #{tpu_custom_call.1} parent=11 // pred_fallthru
          _
      $region12: #{tpu_custom_call.1} parent=5 // pred_fallthru
        _
      %p147 = scmp.lt.s32.totalorder %s16, 2
      // Predicated region
      $region17: #{tpu_custom_call.1} parent=5 // pred_check
        %p148 = pneg %p147
      $region18: #{tpu_custom_call.1} parent=5 // pred_check_branch
        %150 = sbr.rel (%p148) target = $region20
      $region19: #{tpu_custom_call.1} parent=5 // pred_region
        // Predicated region
        $region21: #{tpu_custom_call.1} parent=19 // pred_check
          %p151 = pneg %p50
        $region22: #{tpu_custom_call.1} parent=19 // pred_check_branch
          %153 = sbr.rel (%p151) target = $region24
        $region23: #{tpu_custom_call.1} parent=19 // pred_region
          %s154 = sadd.s32 %s23, %s24
          %s155 = smul.u32 8, %s154
          %p156 = scmp.lt.s32.totalorder %s155, 15
          %s157 = scalar_select %p156, %s155, 15
          %s158 = smul.addr %s157, 8
          %s159 = scalar_lea.vmem %s0, %s158
          %s160 = sadd.s32 %s23, %s24
          %s161 = smul.u32 8, %s160
        $region24: #{tpu_custom_call.1} parent=19 // pred_fallthru
          _
      $region20: #{tpu_custom_call.1} parent=5 // pred_fallthru
        _
      %p162 = scmp.le.s32.totalorder 1, %s16
      %p163 = scmp.lt.s32.totalorder %s16, 3
      %p164 = pnand %p162, %p163
      %p165 = pneg %p164
      // Predicated region
      $region25: #{tpu_custom_call.1} parent=5 // pred_check
        _
      $region26: #{tpu_custom_call.1} parent=5 // pred_check_branch
        %167 = sbr.rel (%p164) target = $region28
      $region27: #{tpu_custom_call.1} parent=5 // pred_region
        %s168 = ssub.s32 %s16, 1
        %s169 = sadd.s32 %s25, %s26
        %s170 = smul.u32 8, %s169
        %p171 = scmp.lt.s32.totalorder %s170, 15
        %s172 = scalar_select %p171, %s170, 15
        %s173 = smul.addr %s172, 8
        %s174 = scalar_lea.vmem %s0, %s173
        %p175 = pneg %p56
        %p176 = pneg %p53
        %p177 = pneg %p77
        %p178 = pneg %p74
        %p179 = pneg %p103
        %p180 = pneg %p100
        %s181 = sand.u32 %s90, 1
        %s182 = scalar_lea.sflag [#allocation3], %s181
        %s183 = sand.u32 %s90, 1
        %s184 = scalar_lea.vmem [#allocation2], %s183
        %p185 = pneg %p129
        %p186 = pneg %p126
        %s187 = sand.u32 %s116, 1
        %s188 = scalar_lea.sflag [#allocation5], %s187
        %s189 = sand.u32 %s116, 1
        %s190 = smul.addr %s189, 32
        %s191 = scalar_lea.vmem [#allocation4], %s190
        %s192 = sadd.s32 %s25, %s26
        %s193 = smul.u32 8, %s192
        %p194 = scmp.lt.s32.totalorder %s193, 15
        %s195 = scalar_select %p194, %s193, 15
        %s196 = smul.addr %s195, 8
        %s197 = scalar_lea.vmem %s0, %s196
        %s198 = sadd.s32 %s25, %s26
        %s199 = smul.u32 8, %s198
        %p200 = scmp.eq.s32.totalorder %s26, 0
        // Predicated region
        $region29: #{tpu_custom_call.1} parent=27 // pred_check
          %p201 = pneg %p200
        $region30: #{tpu_custom_call.1} parent=27 // pred_check_branch
          %203 = sbr.rel (%p201) target = $region32
        $region31: #{tpu_custom_call.1} parent=27 // pred_region
          %vm204 = vcmask 253952
          %205 = vst.msk [vmem:[%s184] sm:$0x1] %vm204, 0.0
          %vm206 = vcmask 261120
          %207 = vst.msk [vmem:[%s191] sm:$0xff] %vm206, 0.0
          %208 = vst.msk [vmem:[%s191 + $0x8] sm:$0xff] %vm206, 0.0
          %209 = vst.msk [vmem:[%s191 + $0x10] sm:$0xff] %vm206, 0.0
          %210 = vst.msk [vmem:[%s191 + $0x18] sm:$0xff] %vm206, 0.0
        $region32: #{tpu_custom_call.1} parent=27 // pred_fallthru
          _
        %v211 = vld [vmem:[%s197] sm:$0xff]
        %v212 = vld [vmem:[%s197 + $0x8] sm:$0xff]
        %v213 = vld [vmem:[%s197 + $0x10] sm:$0xff]
        %v214 = vld [vmem:[%s197 + $0x18] sm:$0xff]
        %v215 = vld [vmem:[%s197 + $0x20] sm:$0xff]
        %v216 = vld [vmem:[%s197 + $0x28] sm:$0xff]
        %v217 = vld [vmem:[%s197 + $0x30] sm:$0xff]
        %v218 = vld [vmem:[%s197 + $0x38] sm:$0xff]
        %v219 = vld [vmem:[%s1] sm:$0x1]
        %v221 = vperm.slane %v219, 0
        %v223 = vsub.f32 %v211, %v221
        %v224 = vsub.f32 %v212, %v221
        %v225 = vsub.f32 %v213, %v221
        %v226 = vsub.f32 %v214, %v221
        %v227 = vsub.f32 %v215, %v221
        %v228 = vsub.f32 %v216, %v221
        %v229 = vsub.f32 %v217, %v221
        %v230 = vsub.f32 %v218, %v221
        %v231 = vld [vmem:[%s184] sm:$0x1]
        %vm232 = vcmask 261120
        %v233 = vsel %vm232, %v223, 0.0
        %v234 = vsel %vm232, %v224, 0.0
        %v235 = vadd.f32 %v233, %v234
        %v236 = vsel %vm232, %v225, 0.0
        %v237 = vadd.f32 %v235, %v236
        %v238 = vsel %vm232, %v226, 0.0
        %v239 = vadd.f32 %v237, %v238
        %v240 = vsel %vm232, %v227, 0.0
        %v241 = vadd.f32 %v239, %v240
        %v242 = vsel %vm232, %v228, 0.0
        %v243 = vadd.f32 %v241, %v242
        %v244 = vsel %vm232, %v229, 0.0
        %v245 = vadd.f32 %v243, %v244
        %v246 = vsel %vm232, %v230, 0.0
        %v247 = vadd.f32 %v245, %v246
        %v248 = vrot.slane %v247, 4
        %v249 = vadd.f32 %v247, %v248
        %v250 = vrot.slane %v249, 2
        %v251 = vadd.f32 %v249, %v250
        %v252 = vrot.slane %v251, 1
        %v253 = vadd.f32 %v251, %v252
        %v254 = vadd.f32 %v231, %v253
        %vm255 = vcmask 253952
        %256 = vst.msk [vmem:[%s184] sm:$0x1] %vm255, %v254
        %v257 = vld [vmem:[%s191] sm:$0xff]
        %v258 = vld [vmem:[%s191 + $0x8] sm:$0xff]
        %v259 = vld [vmem:[%s191 + $0x10] sm:$0xff]
        %v260 = vld [vmem:[%s191 + $0x18] sm:$0xff]
        %261 = vxpose.xlu0.b32.start [1/16] %v223, 128
        %262 = vxpose.xlu0.b32.cont [2/16] %v224, 128
        %263 = vxpose.xlu0.b32.cont [3/16] %v225, 128
        %264 = vxpose.xlu0.b32.cont [4/16] %v226, 128
        %265 = vxpose.xlu0.b32.cont [5/16] %v227, 128
        %266 = vxpose.xlu0.b32.cont [6/16] %v228, 128
        %267 = vxpose.xlu0.b32.cont [7/16] %v229, 128
        %268 = vxpose.xlu0.b32.cont [8/16] %v230, 128
        %269 = vxpose.xlu0.b32.cont [9/16] 0.0, 128
        %270 = vxpose.xlu0.b32.cont [10/16] 0.0, 128
        %271 = vxpose.xlu0.b32.cont [11/16] 0.0, 128
        %272 = vxpose.xlu0.b32.cont [12/16] 0.0, 128
        %273 = vxpose.xlu0.b32.cont [13/16] 0.0, 128
        %274 = vxpose.xlu0.b32.cont [14/16] 0.0, 128
        %275 = vxpose.xlu0.b32.cont [15/16] 0.0, 128
        %276 = vxpose.xlu0.b32.end [16/16] 0.0, 128
        %v277 = vpop.trf.xlu0
        %v278 = vpop.trf.xlu0
        %v279 = vpop.trf.xlu0
        %v280 = vpop.trf.xlu0
        %v281 = vpop.trf.xlu0
        %v282 = vpop.trf.xlu0
        %v283 = vpop.trf.xlu0
        %v284 = vpop.trf.xlu0
        %v285 = vpop.trf.xlu0
        %v286 = vpop.trf.xlu0
        %v287 = vpop.trf.xlu0
        %v288 = vpop.trf.xlu0
        %v289 = vpop.trf.xlu0
        %v290 = vpop.trf.xlu0
        %v291 = vpop.trf.xlu0
        %v292 = vpop.trf.xlu0
        %vm293 = vcmask 523264
        %v295 = vsel %vm293, %v277, 0
        %v298 = vsel %vm293, %v278, 0
        %v301 = vsel %vm293, %v279, 0
        %v304 = vsel %vm293, %v280, 0
        %306 = vmatpush.msra.mxu0 0.0
        %307 = vmatpush.msra.mxu0 0.0
        %308 = vmatpush.msra.mxu0 0.0
        %309 = vmatpush.msra.mxu0 0.0
        %310 = vmatpush.msra.mxu0 0.0
        %311 = vmatpush.msra.mxu0 0.0
        %312 = vmatpush.msra.mxu0 0.0
        %313 = vmatpush.msra.mxu0 0.0
        %314 = vmatpush.msra.mxu0 %v230
        %315 = vmatpush.msra.mxu0 %v229
        %316 = vmatpush.msra.mxu0 %v228
        %317 = vmatpush.msra.mxu0 %v227
        %318 = vmatpush.msra.mxu0 %v226
        %319 = vmatpush.msra.mxu0 %v225
        %320 = vmatpush.msra.mxu0 %v224
        %321 = vmatpush.msra.mxu0 %v223
        %322 = vmatmul.f32.gmra.mxu0 %v295
        %v323 = vpop.f32.mrf.mxu0
        %v324 = vadd.f32 0.0, %v323
        %325 = vmatmul.f32.gmra.mxu0 %v298
        %v326 = vpop.f32.mrf.mxu0
        %v327 = vadd.f32 0.0, %v326
        %328 = vmatmul.f32.gmra.mxu0 %v301
        %v329 = vpop.f32.mrf.mxu0
        %v330 = vadd.f32 0.0, %v329
        %331 = vmatmul.f32.gmra.mxu0 %v304
        %v332 = vpop.f32.mrf.mxu0
        %v333 = vadd.f32 0.0, %v332
        %334 = vdwg.mxu0
        %v335 = vadd.f32 %v257, %v324
        %v336 = vadd.f32 %v258, %v327
        %v337 = vadd.f32 %v259, %v330
        %v338 = vadd.f32 %v260, %v333
        %339 = vst.msk [vmem:[%s191] sm:$0xff] %vm232, %v335
        %340 = vst.msk [vmem:[%s191 + $0x8] sm:$0xff] %vm232, %v336
        %341 = vst.msk [vmem:[%s191 + $0x10] sm:$0xff] %vm232, %v337
        %342 = vst.msk [vmem:[%s191 + $0x18] sm:$0xff] %vm232, %v338
        %s343 = sand.u32 %s90, 1
        %s344 = scalar_lea.sflag [#allocation3], %s343
        %s345 = sand.u32 %s90, 1
        %s346 = scalar_lea.vmem [#allocation2], %s345
        %s347 = sand.u32 %s116, 1
        %s348 = scalar_lea.sflag [#allocation5], %s347
        %s349 = sand.u32 %s116, 1
        %s350 = smul.addr %s349, 32
        %s351 = scalar_lea.vmem [#allocation4], %s350
        // Predicated region
        $region33: #{tpu_custom_call.1} parent=27 // pred_check
          %p352 = pneg %p100
        $region34: #{tpu_custom_call.1} parent=27 // pred_check_branch
          %354 = sbr.rel (%p352) target = $region36
        $region35: #{tpu_custom_call.1} parent=27 // pred_region
          %356 = vsyncadd %s344, 0
          %s357 = scalar_lea.hbm %s2, %s25
          %s359 = sshll.u32 %s346, 4
          %s360 = int_to_ptr.vmem [resolvable:$true] %s359
          %s361 = sshll.u32 %s357, 4
          %s362 = int_to_ptr.hbm [resolvable:$true] %s361
          %364 = dma.vmem_to_hbm [thread:$0]  %s360, 16, %s362, %s344
        $region36: #{tpu_custom_call.1} parent=27 // pred_fallthru
          _
        // Predicated region
        $region37: #{tpu_custom_call.1} parent=27 // pred_check
          %p365 = pneg %p126
        $region38: #{tpu_custom_call.1} parent=27 // pred_check_branch
          %367 = sbr.rel (%p365) target = $region40
        $region39: #{tpu_custom_call.1} parent=27 // pred_region
          %369 = vsyncadd %s348, 0
          %s370 = smul.addr %s25, 4
          %s371 = smul.addr %s370, 8
          %s372 = scalar_lea.hbm %s3, %s371
          %s373 = sshll.u32 %s351, 4
          %s374 = int_to_ptr.vmem [resolvable:$true] %s373
          %s375 = sshll.u32 %s372, 4
          %s376 = int_to_ptr.hbm [resolvable:$true] %s375
          %381 = dma.vmem_to_hbm [thread:$0]  %s374, 512, %s376, %s348, 128, 128, 8
        $region40: #{tpu_custom_call.1} parent=27 // pred_fallthru
          _
      $region28: #{tpu_custom_call.1} parent=5 // pred_fallthru
        _
      %p382 = scmp.le.s32.totalorder 2, %s16
      // Predicated region
      $region41: #{tpu_custom_call.1} parent=5 // pred_check
        %p383 = pneg %p382
      $region42: #{tpu_custom_call.1} parent=5 // pred_check_branch
        %385 = sbr.rel (%p383) target = $region44
      $region43: #{tpu_custom_call.1} parent=5 // pred_region
        %s386 = ssub.s32 %s16, 2
        // Predicated region
        $region45: #{tpu_custom_call.1} parent=43 // pred_check
          %p387 = pneg %p106
        $region46: #{tpu_custom_call.1} parent=43 // pred_check_branch
          %389 = sbr.rel (%p387) target = $region48
        $region47: #{tpu_custom_call.1} parent=43 // pred_region
          %s390 = sand.u32 %s91, 1
          %s391 = scalar_lea.sflag [#allocation3], %s390
          %s392 = sand.u32 %s91, 1
          %s393 = scalar_lea.vmem [#allocation2], %s392
          %395 = dma.done %s391, 16
        $region48: #{tpu_custom_call.1} parent=43 // pred_fallthru
          _
        // Predicated region
        $region49: #{tpu_custom_call.1} parent=43 // pred_check
          %p396 = pneg %p132
        $region50: #{tpu_custom_call.1} parent=43 // pred_check_branch
          %398 = sbr.rel (%p396) target = $region52
        $region51: #{tpu_custom_call.1} parent=43 // pred_region
          %s399 = sand.u32 %s117, 1
          %s400 = scalar_lea.sflag [#allocation5], %s399
          %s401 = sand.u32 %s117, 1
          %s402 = smul.addr %s401, 32
          %s403 = scalar_lea.vmem [#allocation4], %s402
          %405 = dma.done %s400, 512
        $region52: #{tpu_custom_call.1} parent=43 // pred_fallthru
          _
      $region44: #{tpu_custom_call.1} parent=5 // pred_fallthru
        _
    $region6: #{tpu_custom_call.1} parent=1 // loop_footer
      %s20 = sadd.s32 1, %s16
    $region7: #{tpu_custom_call.1} parent=1 // loop_footer_branch
      %15 = sbr.rel target = $region3
    $region8: #{tpu_custom_call.1} parent=1 // loop_exit
      _
    %406 = vsyncpa [#allocation3], 1
    %s407 = scalar_lea.sflag [#allocation3], 1
    %408 = vsyncpa %s407, 1
    %409 = vsyncpa [#allocation5], 1
    %s410 = scalar_lea.sflag [#allocation5], 1
    %411 = vsyncpa %s410, 1

</llo_original>
